<compile_context>
chip_gen: v6e
topology: v6e:2x2x1
jax: 0.10.0
libtpu: 0.0.40
codegen_flags: <defaults>
</compile_context>

<pallas_src>
import jax
import jax.numpy as jnp
from jax.experimental import pallas as pl
from jax.experimental.pallas import tpu as pltpu

LANE = 128  # hidden dim padded to the lane width


def _round_up(n, m):
    return ((n + m - 1) // m) * m


def _vmem_budget():
    """Per-generation VMEM budget: ~3/4 of physical (96 MiB on 128 MiB parts,
    48 MiB on v7x's 64 MiB)."""
    try:
        cap = pltpu.get_tpu_info().vmem_capacity_bytes
    except Exception:
        cap = 64 << 20  # assume the smallest (v7x) part if the query fails
    return min((cap * 3) // 4, cap - (8 << 20))


def _choose_tb(batch, k, h_pad, n, resident_bytes, budget):
    """Largest batch tile (multiple of 8, <= 1024) whose per-step footprint
    (double-buffered x/out tiles + in-kernel intermediates) fits the budget,
    clipped to the batch and split so the grid has >= 2 steps (v7x megacore)."""
    tb = 1024
    while tb > 16:
        per_step = (2 * tb * k * 4          # double-buffered f32 x tiles
                    + 2 * tb * n * 4        # double-buffered f32 out tiles
                    + tb * k * 2            # bf16 copy of the x tile
                    + tb * h_pad * (4 + 2)  # f32 hidden + its bf16 copy
                    + tb * n * 4)           # f32 pre-store temp
        if resident_bytes + per_step <= budget:
            break
        tb //= 2
    tb = min(tb, _round_up(batch, 8))
    if batch >= 16 and _round_up(batch, tb) // tb < 2:
        tb = max(8, _round_up((batch + 1) // 2, 8))   # ensure >= 2 grid steps
    return tb


def _moco_kernel(alpha_ref, x_ref, w1_ref, b1_ref, w2_ref, b2_ref, o_ref):
    # Linear 1: cast the f32 input tile to bf16 in VMEM, MXU dot, f32 accumulation.
    x = x_ref[...].astype(jnp.bfloat16)
    h = jnp.dot(x, w1_ref[...], preferred_element_type=jnp.float32)
    h = h + b1_ref[...]
    # PReLU (single shared slope; nn.PReLU() default num_parameters=1, init=0.25)
    a = alpha_ref[0, 0]
    h = jnp.where(h > 0.0, h, a * h)
    # Linear 2: bf16 activations on the MXU, f32 accumulation, unpadded-N output.
    o = jnp.dot(h.astype(jnp.bfloat16), w2_ref[...],
                preferred_element_type=jnp.float32)
    o_ref[...] = o + b2_ref[...]


def moco_forward(x, w1, b1, alpha, w2, b2):
    """x: [B, in] f32. w1: [in, hid], b1: [hid], w2: [hid, out], b2: [out]."""
    B, K = x.shape
    H = w1.shape[1]
    N = w2.shape[1]
    H_pad = _round_up(H, LANE)

    # Only the (tiny, resident) weights are padded/cast in the wrapper.  The
    # zero padding of the hidden dim is exact: padded b1 cols -> h = 0 ->
    # PReLU(0) = 0, and the padded w2 rows are zero.
    w1_p = jnp.pad(w1.astype(jnp.bfloat16), ((0, 0), (0, H_pad - H)))
    w2_p = jnp.pad(w2.astype(jnp.bfloat16), ((0, H_pad - H), (0, 0)))
    b1_p = jnp.pad(b1.astype(jnp.float32), (0, H_pad - H)).reshape(1, H_pad)
    b2_p = b2.astype(jnp.float32).reshape(1, N)
    alpha_2d = jnp.asarray(alpha, jnp.float32).reshape(1, 1)

    budget = _vmem_budget()
    resident_bytes = (w1_p.size * 2 + w2_p.size * 2 + b1_p.size * 4 + b2_p.size * 4)
    TB = _choose_tb(B, K, H_pad, N, resident_bytes, budget - (4 << 20))
    B_pad = _round_up(B, TB)

    x_in = x.astype(jnp.float32)
    if B_pad != B:
        x_in = jnp.pad(x_in, ((0, B_pad - B), (0, 0)))

    grid = (B_pad // TB,)
    resident = dict(pipeline_mode=pl.Buffered(1))   # single-buffer constant blocks

    out = pl.pallas_call(
        _moco_kernel,
        out_shape=jax.ShapeDtypeStruct((B_pad, N), jnp.float32),
        grid_spec=pl.GridSpec(
            grid=grid,
            in_specs=[
                pl.BlockSpec(memory_space=pltpu.MemorySpace.SMEM),          # alpha
                pl.BlockSpec((TB, K), lambda i: (i, 0)),                    # x tile
                pl.BlockSpec((K, H_pad), lambda i: (0, 0), **resident),     # w1
                pl.BlockSpec((1, H_pad), lambda i: (0, 0), **resident),     # b1
                pl.BlockSpec((H_pad, N), lambda i: (0, 0), **resident),     # w2
                pl.BlockSpec((1, N), lambda i: (0, 0), **resident),         # b2
            ],
            out_specs=pl.BlockSpec((TB, N), lambda i: (i, 0)),
        ),
        compiler_params=pltpu.CompilerParams(
            dimension_semantics=("parallel",),   # shard batch tiles across TCs (v7x)
            vmem_limit_bytes=budget,
        ),
    )(alpha_2d, x_in, w1_p, b1_p, w2_p, b2_p)

    return out[:B] if B_pad != B else out


if __name__ == "__main__":
    # TODO(synk): encoder_k, the momentum update and the queue buffers are not part
    # of forward(), so only encoder_q (Linear -> PReLU -> Linear) is implemented.
    input_dim, hidden_dim, output_dim = 32, 64, 16
    B = 8

    key = jax.random.PRNGKey(0)
    kx, kw1, kb1, kw2, kb2, kx2 = jax.random.split(key, 6)
    bound1 = 1.0 / jnp.sqrt(jnp.float32(input_dim))
    bound2 = 1.0 / jnp.sqrt(jnp.float32(hidden_dim))
    # stored as [in, out] (transpose of PyTorch's [out, in] weight layout)
    w1 = jax.random.uniform(kw1, (input_dim, hidden_dim), jnp.float32, -bound1, bound1)
    b1 = jax.random.uniform(kb1, (hidden_dim,), jnp.float32, -bound1, bound1)
    w2 = jax.random.uniform(kw2, (hidden_dim, output_dim), jnp.float32, -bound2, bound2)
    b2 = jax.random.uniform(kb2, (output_dim,), jnp.float32, -bound2, bound2)
    alpha = jnp.float32(0.25)   # nn.PReLU() default init

    def ref_fwd(xx):
        h = xx @ w1 + b1
        h = jnp.where(h > 0, h, alpha * h)
        return h @ w2 + b2

    # Small batch (single grid step)
    x = jax.random.normal(kx, (B, input_dim), jnp.float32)
    out = jax.block_until_ready(moco_forward(x, w1, b1, alpha, w2, b2))
    ref = ref_fwd(x)
    assert out.shape == (B, output_dim)
    assert jnp.allclose(out, ref, atol=3e-2, rtol=3e-2), float(jnp.max(jnp.abs(out - ref)))

    # Non-tile-aligned larger batch: multiple grid steps + row padding/slicing
    B2 = 300
    x2 = jax.random.normal(kx2, (B2, input_dim), jnp.float32)
    out2 = jax.block_until_ready(moco_forward(x2, w1, b1, alpha, w2, b2))
    ref2 = ref_fwd(x2)
    assert out2.shape == (B2, output_dim)
    assert jnp.allclose(out2, ref2, atol=3e-2, rtol=3e-2), float(jnp.max(jnp.abs(out2 - ref2)))

    print("KERNEL_OK")
</pallas_src>

<mosaic_0001>
module attributes {stable_mosaic.version = 11 : i64} {
  func.func @_moco_kernel(%arg0: i32, %arg1: memref<1x1xf32, #tpu.memory_space<smem>>, %arg2: memref<8x32xf32, #tpu.memory_space<vmem>>, %arg3: memref<32x128xbf16, #tpu.memory_space<vmem>>, %arg4: memref<1x128xf32, #tpu.memory_space<vmem>>, %arg5: memref<128x16xbf16, #tpu.memory_space<vmem>>, %arg6: memref<1x16xf32, #tpu.memory_space<vmem>>, %arg7: memref<8x16xf32, #tpu.memory_space<vmem>>) attributes {dimension_semantics = [#tpu.dimension_semantics<parallel>], iteration_bounds = array<i64: 1>, scalar_prefetch = 0 : i64, scratch_operands = 0 : i64, tpu.core_type = #tpu.core_type<tc>, window_params = [{transform_indices = @transform_0, window_bounds = array<i64: 1, 1>}, {transform_indices = @transform_1, window_bounds = array<i64: 8, 32>}, {pipeline_mode = #tpu.pipeline_mode<synchronous>, transform_indices = @transform_2, window_bounds = array<i64: 32, 128>}, {pipeline_mode = #tpu.pipeline_mode<synchronous>, transform_indices = @transform_3, window_bounds = array<i64: 1, 128>}, {pipeline_mode = #tpu.pipeline_mode<synchronous>, transform_indices = @transform_4, window_bounds = array<i64: 128, 16>}, {pipeline_mode = #tpu.pipeline_mode<synchronous>, transform_indices = @transform_5, window_bounds = array<i64: 1, 16>}, {transform_indices = @transform_6, window_bounds = array<i64: 8, 16>}]} {
    %c0 = arith.constant 0 : index
    %c0_0 = arith.constant 0 : index
    %0 = vector.load %arg2[%c0, %c0_0] : memref<8x32xf32, #tpu.memory_space<vmem>>, vector<8x32xf32>
    %1 = arith.truncf %0 : vector<8x32xf32> to vector<8x32xbf16>
    %c0_1 = arith.constant 0 : index
    %c0_2 = arith.constant 0 : index
    %2 = vector.load %arg3[%c0_1, %c0_2] : memref<32x128xbf16, #tpu.memory_space<vmem>>, vector<32x128xbf16>
    %cst = arith.constant dense<0.000000e+00> : vector<8x128xf32>
    %3 = tpu.matmul %1, %2, %cst {dimension_numbers = #tpu.dot_dimension_numbers<[1], [0], [0], [1], [0, 0, 1, 1], [], []>} : vector<8x32xbf16>, vector<32x128xbf16>, vector<8x128xf32> -> vector<8x128xf32>
    %c0_3 = arith.constant 0 : index
    %c0_4 = arith.constant 0 : index
    %4 = vector.load %arg4[%c0_3, %c0_4] : memref<1x128xf32, #tpu.memory_space<vmem>>, vector<1x128xf32>
    %5 = vector.broadcast %4 : vector<1x128xf32> to vector<8x128xf32>
    %6 = arith.addf %3, %5 : vector<8x128xf32>
    %c0_5 = arith.constant 0 : index
    %c0_6 = arith.constant 0 : index
    %7 = memref.load %arg1[%c0_5, %c0_6] : memref<1x1xf32, #tpu.memory_space<smem>>
    %cst_7 = arith.constant 0.000000e+00 : f32
    %8 = vector.broadcast %cst_7 : f32 to vector<8x128xf32>
    %9 = arith.cmpf ogt, %6, %8 : vector<8x128xf32>
    %10 = vector.broadcast %7 : f32 to vector<8x128xf32>
    %11 = arith.mulf %10, %6 : vector<8x128xf32>
    %12 = arith.select %9, %6, %11 : vector<8x128xi1>, vector<8x128xf32>
    %13 = arith.truncf %12 : vector<8x128xf32> to vector<8x128xbf16>
    %c0_8 = arith.constant 0 : index
    %c0_9 = arith.constant 0 : index
    %14 = vector.load %arg5[%c0_8, %c0_9] : memref<128x16xbf16, #tpu.memory_space<vmem>>, vector<128x16xbf16>
    %cst_10 = arith.constant dense<0.000000e+00> : vector<8x16xf32>
    %15 = tpu.matmul %13, %14, %cst_10 {dimension_numbers = #tpu.dot_dimension_numbers<[1], [0], [0], [1], [0, 0, 1, 1], [], []>} : vector<8x128xbf16>, vector<128x16xbf16>, vector<8x16xf32> -> vector<8x16xf32>
    %c0_11 = arith.constant 0 : index
    %c0_12 = arith.constant 0 : index
    %16 = vector.load %arg6[%c0_11, %c0_12] : memref<1x16xf32, #tpu.memory_space<vmem>>, vector<1x16xf32>
    %17 = vector.broadcast %16 : vector<1x16xf32> to vector<8x16xf32>
    %18 = arith.addf %15, %17 : vector<8x16xf32>
    %c0_13 = arith.constant 0 : index
    %c0_14 = arith.constant 0 : index
    %19 = vector.load %arg7[%c0_13, %c0_14] : memref<8x16xf32, #tpu.memory_space<vmem>>, vector<8x16xf32>
    tpu.vector_store %arg7[%c0_13, %c0_14], %18 {strides = array<i32>} : memref<8x16xf32, #tpu.memory_space<vmem>>, vector<8x16xf32>,
    return
  }
  func.func @transform_0(%arg0: i32) -> (i32, i32) {
    %c0_i32 = arith.constant 0 : i32
    %c0_i32_0 = arith.constant 0 : i32
    %c0_i32_1 = arith.constant 0 : i32
    return %c0_i32, %c0_i32_0 : i32, i32
  }
  func.func @transform_1(%arg0: i32) -> (i32, i32) {
    %c0_i32 = arith.constant 0 : i32
    %c0_i32_0 = arith.constant 0 : i32
    return %arg0, %c0_i32 : i32, i32
  }
  func.func @transform_2(%arg0: i32) -> (i32, i32) {
    %c0_i32 = arith.constant 0 : i32
    %c0_i32_0 = arith.constant 0 : i32
    %c0_i32_1 = arith.constant 0 : i32
    return %c0_i32, %c0_i32_0 : i32, i32
  }
  func.func @transform_3(%arg0: i32) -> (i32, i32) {
    %c0_i32 = arith.constant 0 : i32
    %c0_i32_0 = arith.constant 0 : i32
    %c0_i32_1 = arith.constant 0 : i32
    return %c0_i32, %c0_i32_0 : i32, i32
  }
  func.func @transform_4(%arg0: i32) -> (i32, i32) {
    %c0_i32 = arith.constant 0 : i32
    %c0_i32_0 = arith.constant 0 : i32
    %c0_i32_1 = arith.constant 0 : i32
    return %c0_i32, %c0_i32_0 : i32, i32
  }
  func.func @transform_5(%arg0: i32) -> (i32, i32) {
    %c0_i32 = arith.constant 0 : i32
    %c0_i32_0 = arith.constant 0 : i32
    %c0_i32_1 = arith.constant 0 : i32
    return %c0_i32, %c0_i32_0 : i32, i32
  }
  func.func @transform_6(%arg0: i32) -> (i32, i32) {
    %c0_i32 = arith.constant 0 : i32
    %c0_i32_0 = arith.constant 0 : i32
    return %arg0, %c0_i32 : i32, i32
  }
}

</mosaic_0001>

<llo_original>
// kernel: tpu_custom_call.1
$region0: #{tpu_custom_call.1}
  #allocation0 [shape = 'u32[]', space=smem, size = 0x4, offset = 0x4, fixed_abs, tag = 'smem constant byte address 0x4 - core index']
  #allocation1 [shape = 'u32[144,128]{1,0:T(1,128)}', space=vmem, size = 0x12000, scoped, tag = 'internal scratch']
  #allocation2 [shape = 'f32[1,1]{1,0:T(1,128)S(6)}', space=smem, size = 0x200, scoped, tag = 'scoped memory for tpu_custom_call.1']
  %s0 = inlined_call_operand.<no memory space> [shape: f32[1,1], index: 0, kind: input, shape index: {}]
  %s1 = inlined_call_operand.vmem [shape: f32[8,32], index: 1, kind: input, shape index: {}]
  %s2 = inlined_call_operand.vmem [shape: bf16[32,128], index: 2, kind: input, shape index: {}]
  %s3 = inlined_call_operand.vmem [shape: f32[1,128], index: 3, kind: input, shape index: {}]
  %s4 = inlined_call_operand.vmem [shape: bf16[128,16], index: 4, kind: input, shape index: {}]
  %s5 = inlined_call_operand.vmem [shape: f32[1,16], index: 5, kind: input, shape index: {}]
  %s6 = inlined_call_operand.hbm [shape: f32[8,16], index: 6, kind: output, shape index: {}]
  %s7 = sld [smem:[#allocation0]]
  $region34: #{tpu_custom_call.1} parent=0
    _
  %s9 = ssub.s32 1, %s7
  %s10 = scalar_select 0, %s9, %s7
  %11 = sst [smem:[#allocation2]] %s0
  $region1: #{tpu_custom_call.1} parent=0
    #allocation3 [shape = 'u8[4096]{0}', space=vmem, size = 0x1000, scoped, tag = 'output window, operand 0, single buffered']
    #allocation4 [shape = 's32[1]{0}', space=sflag, size = 0x4, scoped, tag = 'scoped memory for tpu_custom_call.1']
    %12 = vsyncpa [#allocation4], 0
    // Predicated region
    $region2: #{tpu_custom_call.1} parent=1 // pred_check
      _
    $region3: #{tpu_custom_call.1} parent=1 // pred_check_branch
      %14 = sbr.rel (0) target = $region5
    $region4: #{tpu_custom_call.1} parent=1 // pred_region
      _
    $region5: #{tpu_custom_call.1} parent=1 // pred_fallthru
      _
    // Predicated region
    $region6: #{tpu_custom_call.1} parent=1 // pred_check
      _
    $region7: #{tpu_custom_call.1} parent=1 // pred_check_branch
      %16 = sbr.rel (0) target = $region9
    $region8: #{tpu_custom_call.1} parent=1 // pred_region
      _
    $region9: #{tpu_custom_call.1} parent=1 // pred_fallthru
      _
    // Predicated region
    $region10: #{tpu_custom_call.1} parent=1 // pred_check
      _
    $region11: #{tpu_custom_call.1} parent=1 // pred_check_branch
      %18 = sbr.rel (0) target = $region13
    $region12: #{tpu_custom_call.1} parent=1 // pred_region
      _
    $region13: #{tpu_custom_call.1} parent=1 // pred_fallthru
      _
    // Predicated region
    $region14: #{tpu_custom_call.1} parent=1 // pred_check
      _
    $region15: #{tpu_custom_call.1} parent=1 // pred_check_branch
      %20 = sbr.rel (0) target = $region17
    $region16: #{tpu_custom_call.1} parent=1 // pred_region
      _
    $region17: #{tpu_custom_call.1} parent=1 // pred_fallthru
      _
    // Predicated region
    $region18: #{tpu_custom_call.1} parent=1 // pred_check
      _
    $region19: #{tpu_custom_call.1} parent=1 // pred_check_branch
      %22 = sbr.rel (0) target = $region21
    $region20: #{tpu_custom_call.1} parent=1 // pred_region
      _
    $region21: #{tpu_custom_call.1} parent=1 // pred_fallthru
      _
    // Predicated region
    $region22: #{tpu_custom_call.1} parent=1 // pred_check
      _
    $region23: #{tpu_custom_call.1} parent=1 // pred_check_branch
      %24 = sbr.rel (0) target = $region25
    $region24: #{tpu_custom_call.1} parent=1 // pred_region
      _
    $region25: #{tpu_custom_call.1} parent=1 // pred_fallthru
      _
    %v26 = vld [vmem:[%s1] sm:$0xff]
    %v27 = vpack.c.bf16 %v26, %v26
    %v28 = vld [vmem:[%s2] sm:$0xf]
    %v29 = vld [vmem:[%s2 + $0x4] sm:$0xf]
    %v30 = vld [vmem:[%s2 + $0x8] sm:$0xf]
    %v31 = vld [vmem:[%s2 + $0xc] sm:$0xf]
    %v32 = vld [vmem:[%s3] sm:$0x1]
    %v34 = vlaneseq
    %v35 = vshrl.u32 %v34, 7
    %v36 = vsub.s32 0, %v35
    %v37 = vrot.slane %v32, %v36
    %v43 = vunpack.c.l.b16 %v28
    %v44 = vunpack.c.l.b16 %v29
    %v45 = vunpack.c.l.b16 %v30
    %v46 = vunpack.c.l.b16 %v31
    %v47 = vpack.c.b16 %v44, %v43
    %v48 = vpack.c.b16 %v46, %v45
    %vm51 = vcmask 261120
    %v53 = vsel %vm51, %v27, 0
    %55 = vmatprep.subr.bf16.mxu0 0
    %56 = vmatpush1.bf16.msra.mxu0 0
    %57 = vmatprep.subr.bf16.mxu0 0
    %58 = vmatpush1.bf16.msra.mxu0 0
    %59 = vmatprep.subr.bf16.mxu0 0
    %60 = vmatpush1.bf16.msra.mxu0 0
    %61 = vmatprep.subr.bf16.mxu0 0
    %62 = vmatpush1.bf16.msra.mxu0 0
    %63 = vmatprep.subr.bf16.mxu0 0
    %64 = vmatpush1.bf16.msra.mxu0 0
    %65 = vmatprep.subr.bf16.mxu0 0
    %66 = vmatpush1.bf16.msra.mxu0 0
    %67 = vmatprep.subr.bf16.mxu0 0
    %68 = vmatpush1.bf16.msra.mxu0 %v48
    %69 = vmatprep.subr.bf16.mxu0 0
    %70 = vmatpush1.bf16.msra.mxu0 %v47
    %71 = vmatprep.subr.bf16.mxu0 0
    %72 = vmatpush2.bf16.msra.mxu0 0
    %73 = vmatprep.subr.bf16.mxu0 0
    %74 = vmatpush2.bf16.msra.mxu0 0
    %75 = vmatprep.subr.bf16.mxu0 0
    %76 = vmatpush2.bf16.msra.mxu0 0
    %77 = vmatprep.subr.bf16.mxu0 0
    %78 = vmatpush2.bf16.msra.mxu0 0
    %79 = vmatprep.subr.bf16.mxu0 0
    %80 = vmatpush2.bf16.msra.mxu0 0
    %81 = vmatprep.subr.bf16.mxu0 0
    %82 = vmatpush2.bf16.msra.mxu0 0
    %83 = vmatprep.subr.bf16.mxu0 0
    %84 = vmatpush2.bf16.msra.mxu0 0
    %85 = vmatprep.subr.bf16.mxu0 0
    %86 = vmatpush2.bf16.msra.mxu0 0
    %87 = vmatprep.mubr.bf16.mxu0 0
    %88 = vmatmul.mubr.bf16.gmra.mxu0 %v53
    %v89 = vpop.f32.mrf.mxu0
    %v90 = vadd.f32 %v37, %v89
    %v91 = vpop.f32.mrf.mxu0
    %v92 = vpop.f32.mrf.mxu0
    %v93 = vpop.f32.mrf.mxu0
    %94 = vdwg.mxu0
    %s95 = sld [smem:[#allocation2]]
    %vm96 = vcmp.gt.f32.partialorder %v90, 0.0
    %v97 = vstv %s95
    %v98 = vmul.f32 %v97, %v90
    %v99 = vsel %vm96, %v90, %v98
    %v100 = vpack.c.bf16 %v99, %v99
    %v101 = vld [vmem:[%s4] sm:$0xf]
    %v102 = vld [vmem:[%s4 + $0x4] sm:$0xf]
    %v103 = vld [vmem:[%s4 + $0x8] sm:$0xf]
    %v104 = vld [vmem:[%s4 + $0xc] sm:$0xf]
    %v105 = vld [vmem:[%s4 + $0x10] sm:$0xf]
    %v106 = vld [vmem:[%s4 + $0x14] sm:$0xf]
    %v107 = vld [vmem:[%s4 + $0x18] sm:$0xf]
    %v108 = vld [vmem:[%s4 + $0x1c] sm:$0xf]
    %v109 = vld [vmem:[%s4 + $0x20] sm:$0xf]
    %v110 = vld [vmem:[%s4 + $0x24] sm:$0xf]
    %v111 = vld [vmem:[%s4 + $0x28] sm:$0xf]
    %v112 = vld [vmem:[%s4 + $0x2c] sm:$0xf]
    %v113 = vld [vmem:[%s4 + $0x30] sm:$0xf]
    %v114 = vld [vmem:[%s4 + $0x34] sm:$0xf]
    %v115 = vld [vmem:[%s4 + $0x38] sm:$0xf]
    %v116 = vld [vmem:[%s4 + $0x3c] sm:$0xf]
    %v117 = vld [vmem:[%s5] sm:$0x1]
    %v119 = vlaneseq
    %v120 = vshrl.u32 %v119, 7
    %v121 = vsub.s32 0, %v120
    %v122 = vrot.slane %v117, %v121
    %v140 = vunpack.c.l.b16 %v101
    %v141 = vunpack.c.l.b16 %v102
    %v142 = vunpack.c.l.b16 %v103
    %v143 = vunpack.c.l.b16 %v104
    %v144 = vunpack.c.l.b16 %v105
    %v145 = vunpack.c.l.b16 %v106
    %v146 = vunpack.c.l.b16 %v107
    %v147 = vunpack.c.l.b16 %v108
    %v148 = vunpack.c.l.b16 %v109
    %v149 = vunpack.c.l.b16 %v110
    %v150 = vunpack.c.l.b16 %v111
    %v151 = vunpack.c.l.b16 %v112
    %v152 = vunpack.c.l.b16 %v113
    %v153 = vunpack.c.l.b16 %v114
    %v154 = vunpack.c.l.b16 %v115
    %v155 = vunpack.c.l.b16 %v116
    %v156 = vpack.c.b16 %v141, %v140
    %v157 = vpack.c.b16 %v143, %v142
    %v158 = vpack.c.b16 %v145, %v144
    %v159 = vpack.c.b16 %v147, %v146
    %v160 = vpack.c.b16 %v149, %v148
    %v161 = vpack.c.b16 %v151, %v150
    %v162 = vpack.c.b16 %v153, %v152
    %v163 = vpack.c.b16 %v155, %v154
    %172 = vmatprep.subr.bf16.mxu0 0
    %173 = vmatpush1.bf16.msra.mxu0 %v163
    %174 = vmatprep.subr.bf16.mxu0 0
    %175 = vmatpush1.bf16.msra.mxu0 %v162
    %176 = vmatprep.subr.bf16.mxu0 0
    %177 = vmatpush1.bf16.msra.mxu0 %v161
    %178 = vmatprep.subr.bf16.mxu0 0
    %179 = vmatpush1.bf16.msra.mxu0 %v160
    %180 = vmatprep.subr.bf16.mxu0 0
    %181 = vmatpush1.bf16.msra.mxu0 %v159
    %182 = vmatprep.subr.bf16.mxu0 0
    %183 = vmatpush1.bf16.msra.mxu0 %v158
    %184 = vmatprep.subr.bf16.mxu0 0
    %185 = vmatpush1.bf16.msra.mxu0 %v157
    %186 = vmatprep.subr.bf16.mxu0 0
    %187 = vmatpush1.bf16.msra.mxu0 %v156
    %188 = vmatprep.subr.bf16.mxu0 0
    %189 = vmatpush2.bf16.msra.mxu0 0
    %190 = vmatprep.subr.bf16.mxu0 0
    %191 = vmatpush2.bf16.msra.mxu0 0
    %192 = vmatprep.subr.bf16.mxu0 0
    %193 = vmatpush2.bf16.msra.mxu0 0
    %194 = vmatprep.subr.bf16.mxu0 0
    %195 = vmatpush2.bf16.msra.mxu0 0
    %196 = vmatprep.subr.bf16.mxu0 0
    %197 = vmatpush2.bf16.msra.mxu0 0
    %198 = vmatprep.subr.bf16.mxu0 0
    %199 = vmatpush2.bf16.msra.mxu0 0
    %200 = vmatprep.subr.bf16.mxu0 0
    %201 = vmatpush2.bf16.msra.mxu0 0
    %202 = vmatprep.subr.bf16.mxu0 0
    %203 = vmatpush2.bf16.msra.mxu0 0
    %204 = vmatprep.mubr.bf16.mxu0 0
    %205 = vmatmul.mubr.bf16.gmra.mxu0 %v100
    %v206 = vpop.f32.mrf.mxu0
    %v207 = vadd.f32 %v122, %v206
    %v208 = vpop.f32.mrf.mxu0
    %v209 = vpop.f32.mrf.mxu0
    %v210 = vpop.f32.mrf.mxu0
    %211 = vdwg.mxu0
    %vm212 = vcmask 130048
    %213 = vst.msk [vmem:[#allocation3] sm:$0xff] %vm212, %v207
    // Predicated region
    $region26: #{tpu_custom_call.1} parent=1 // pred_check
      _
    $region27: #{tpu_custom_call.1} parent=1 // pred_check_branch
      %215 = sbr.rel (0) target = $region29
    $region28: #{tpu_custom_call.1} parent=1 // pred_region
      %s217 = ssub.s32 128, 128
      %218 = vsyncadd [#allocation4], %s217
      %s220 = sshll.u32 [#allocation3], 4
      %s221 = int_to_ptr.vmem [resolvable:$true] %s220
      %223 = dma.vmem_to_hbm [thread:$0]  %s221, 128, %s6, [#allocation4]
    $region29: #{tpu_custom_call.1} parent=1 // pred_fallthru
      _
    // Predicated region
    $region30: #{tpu_custom_call.1} parent=1 // pred_check
      _
    $region31: #{tpu_custom_call.1} parent=1 // pred_check_branch
      %225 = sbr.rel (0) target = $region33
    $region32: #{tpu_custom_call.1} parent=1 // pred_region
      %226 = dma.done [#allocation4], 128
    $region33: #{tpu_custom_call.1} parent=1 // pred_fallthru
      _
    %227 = vsyncpa [#allocation4], 1

</llo_original>
